<compile_context>
chip_gen: v7x
topology: tpu7x:2x2x1
jax: 0.10.0
libtpu: 0.0.40
codegen_flags: <defaults>
</compile_context>

<pallas_src>
import jax
import jax.numpy as jnp
from jax.experimental import pallas as pl
from jax.experimental.pallas import tpu as pltpu

K_CONST = 5.0
EPS = 1e-5


def _biased_sigmoid_kernel(n_sref,      # [B]   i32 in SMEM (scalar prefetch): valid node counts
                           bias_sref,   # [B]   f32 in SMEM (scalar prefetch): precomputed trunk bias
                           x_ref,       # [BB, Np, F]   f32
                           xt_ref,      # [BB, F, Np]   f32 (pre-transposed in wrapper)
                           out_ref):    # [BB, Np, Np]  out dtype
    g = pl.program_id(0)
    bb, npad, feat = x_ref.shape
    inv_f = 1.0 / float(feat)

    # Batch-independent masks from 1-D iotas (separable masks; no 3-D iota/compare passes).
    ri = jax.lax.broadcasted_iota(jnp.int32, (npad, 1), 0)     # [Np, 1]
    ci = jax.lax.broadcasted_iota(jnp.int32, (1, npad), 1)     # [1, Np]
    off_diag = ri != ci                                        # [Np, Np] (single compare pass)

    neg_inf = jnp.float32(-jnp.inf)
    pos_inf = jnp.float32(jnp.inf)

    for b in range(bb):                                        # static unroll; BB is small
        n_b = n_sref[g * bb + b]                               # scalar i32 from SMEM
        bias_b = bias_sref[g * bb + b]                         # scalar f32 from SMEM

        # Gram tile: [Np,F] x [F,Np] -> [Np,Np]; both operands already in MXU-native layout.
        prod = jax.lax.dot_general(
            x_ref[b], xt_ref[b], (((1,), (0,)), ((), ())),
            preferred_element_type=jnp.float32)
        # zero_diag(prod): one select with the 2-D mask.  prod is exactly symmetric (identical
        # f-accumulation order for (i,j) and (j,i)), so 0.5*(A + A^T) is not needed.
        pzd = jnp.where(off_diag, prod, 0.0)

        # Masked min/max over the valid N[b] x N[b] block as separable two-stage reductions:
        # mask cols -> reduce lanes -> mask rows -> reduce sublanes.  The diagonal inside the
        # valid block is exactly 0 in pzd (matching torch's zero_diag-before-min/max); the clamp
        # against 0 only guards the degenerate N[b] == 0 case (torch asserts there instead).
        col_valid = ci < n_b                                   # [1, Np]
        row_valid = ri < n_b                                   # [Np, 1]
        rmax = jnp.max(jnp.where(col_valid, pzd, neg_inf), axis=1, keepdims=True)   # [Np, 1]
        rmin = jnp.min(jnp.where(col_valid, pzd, pos_inf), axis=1, keepdims=True)   # [Np, 1]
        max_e = jnp.maximum(
            jnp.max(jnp.where(row_valid, rmax, neg_inf), axis=0, keepdims=True), 0.0)
        min_e = jnp.minimum(
            jnp.min(jnp.where(row_valid, rmin, pos_inf), axis=0, keepdims=True), 0.0)
        max_e = max_e * inv_f                # == extrema of (prod / F with zeroed diag), exactly
        min_e = min_e * inv_f

        # ((p/F - min)/(max - min + eps) - 0.5)*2K + bias == (p/F)*scale + offset; the /F and the
        # 0.5 of sigmoid(t) = 0.5*tanh(0.5*t) + 0.5 are folded into per-batch (1,1) scalars.
        scale = (2.0 * K_CONST) / (max_e - min_e + jnp.float32(EPS))   # [1, 1]
        offset = -min_e * scale - jnp.float32(K_CONST) + bias_b        # [1, 1]
        half_scale = (0.5 * inv_f) * scale
        half_offset = 0.5 * offset

        a = 0.5 * jnp.tanh(pzd * half_scale + half_offset) + 0.5
        out_ref[b] = jnp.where(off_diag, a, 0.0).astype(out_ref.dtype)


def _vmem_capacity_bytes():
    """Physical VMEM per TensorCore; conservative 64 MiB (v7x) fallback if the query fails."""
    try:
        return int(pltpu.get_tpu_info().vmem_capacity_bytes)
    except Exception:
        return 64 << 20


def _pick_batch_block(B, npad, feat, out_itemsize):
    """Pick the batch block BB and a vmem_limit_bytes value.

    Counts the double-buffered I/O blocks AND the in-kernel temporaries (prod/pzd, the masked
    copy feeding each reduction, the epilogue temp, the 2-D mask), leaves headroom below the
    chip's physical VMEM, and caps BB at B//2 so the grid has >= 2 steps for v7x's two
    TensorCores (one extra ~0.35us grid step on single-TC chips).
    """
    cap = _vmem_capacity_bytes()
    budget = min(int(cap * 0.85), cap - (8 << 20))     # ~54 MiB on v7x, ~109 MiB on v5e/v6e

    def need(bb):
        io = 2 * (2 * bb * npad * feat * 4 + bb * npad * npad * out_itemsize)  # dbl-buf X, X_t, out
        tmp = 4 * bb * npad * npad * 4 + npad * npad * 4                       # in-kernel live temps
        return io + tmp + (2 << 20)                                            # misc / compiler scratch

    bb_cap = max(1, B // 2)
    bb = 1
    for cand in range(bb_cap, 0, -1):
        if B % cand == 0 and need(cand) <= budget:
            bb = cand
            break
    vmem_limit = int(min(budget, max(32 << 20, need(bb) + (4 << 20))))
    return bb, vmem_limit


def biased_sigmoid(X, N, params, out_dtype=jnp.float32):
    """X: [B, Npad, F] float, N: [B] int valid node counts.

    out_dtype=jnp.bfloat16 halves the HBM writeback (useful on write-bound v5e/v6e); the default
    stays f32 so the strict reference check below is meaningful.
    """
    X = X.astype(jnp.float32)
    B, Npad, F = X.shape
    H = params["w1"].shape[1]

    # --- trunk bias: gate * Linear2(ReLU(Linear1(X.mean(1)))) — tiny, done once in plain JAX on
    #     the ORIGINAL (unpadded) X so the mean matches torch exactly. ---
    xm = jnp.mean(X, axis=1)                                              # [B, F]
    h = jnp.maximum(xm @ params["w1"] + params["b1"].reshape(1, H), 0.0)  # [B, H]
    score = h @ params["w2"] + params["b2"].reshape(1, 1)                 # [B, 1]
    bias = (score[:, 0] * params["gate"].reshape(())).astype(jnp.float32) # [B]
    n = N.astype(jnp.int32).reshape(B)

    # Lane-dense node axis: pad small Npad up to 128 lanes, otherwise only round the sublane axis
    # up to 8.  Values inside the returned [0:Npad, 0:Npad] window are unchanged: the extra rows
    # are zero and only participate through the feature contraction.
    if Npad < 128:
        Np = 128
    else:
        Np = ((Npad + 7) // 8) * 8
    Xp = X if Np == Npad else jnp.pad(X, ((0, 0), (0, Np - Npad), (0, 0)))
    Xt = jnp.swapaxes(Xp, 1, 2)              # [B, F, Np] — pre-transposed RHS (no in-kernel vxpose)

    BB, vmem_limit = _pick_batch_block(B, Np, F, jnp.dtype(out_dtype).itemsize)
    grid = (B // BB,)

    out = pl.pallas_call(
        _biased_sigmoid_kernel,
        out_shape=jax.ShapeDtypeStruct((B, Np, Np), out_dtype),
        grid_spec=pltpu.PrefetchScalarGridSpec(
            num_scalar_prefetch=2,           # n, bias -> SMEM scalar prefetch
            grid=grid,
            in_specs=[
                pl.BlockSpec((BB, Np, F), lambda g, n_s, b_s: (g, 0, 0)),
                pl.BlockSpec((BB, F, Np), lambda g, n_s, b_s: (g, 0, 0)),
            ],
            out_specs=pl.BlockSpec((BB, Np, Np), lambda g, n_s, b_s: (g, 0, 0)),
        ),
        compiler_params=pltpu.CompilerParams(
            dimension_semantics=("parallel",),
            vmem_limit_bytes=vmem_limit,
        ),
    )(n, bias, Xp, Xt)

    if Np != Npad:
        out = out[:, :Npad, :Npad]
    return out


def biased_sigmoid_ref(X, N, params):
    """Pure-JAX reference mirroring the PyTorch forward."""
    B, Npad, F = X.shape
    xm = jnp.mean(X, axis=1)                                   # [B, F]
    h = jnp.maximum(xm @ params["w1"] + params["b1"], 0.0)     # [B, H]
    score = h @ params["w2"] + params["b2"]                    # [B, 1]
    bias = (score * params["gate"])[:, :, None]                # [B, 1, 1]

    prod = jnp.einsum("bnf,bmf->bnm", X, X) / F
    eye = jnp.eye(Npad, dtype=bool)[None]
    prod = jnp.where(eye, 0.0, prod)

    row = jnp.arange(Npad)[None, :, None]
    col = jnp.arange(Npad)[None, None, :]
    valid = (row < N[:, None, None]) & (col < N[:, None, None])
    max_e = jnp.max(jnp.where(valid, prod, -jnp.inf), axis=(1, 2), keepdims=True)
    min_e = jnp.min(jnp.where(valid, prod, jnp.inf), axis=(1, 2), keepdims=True)

    prod = ((prod - min_e) / (max_e - min_e + EPS) - 0.5) * 2.0 * K_CONST
    a = jax.nn.sigmoid(prod + bias)
    a = 0.5 * (a + jnp.swapaxes(a, 1, 2))
    return jnp.where(eye, 0.0, a)


if __name__ == "__main__":
    B, Npad, F, H = 2, 16, 32, 32

    key = jax.random.PRNGKey(0)
    kx, k1, k2, k3, k4, k5 = jax.random.split(key, 6)

    X = jax.random.normal(kx, (B, Npad, F), dtype=jnp.float32)
    N = jnp.array([12, 9], dtype=jnp.int32)

    # Deterministic parameter init (shapes from __init__: Linear(F,H), Linear(H,1), gate scalar).
    # gate is set nonzero (module init is zeros) so the trunk-bias path is actually exercised.
    params = {
        "w1": jax.random.normal(k1, (F, H), dtype=jnp.float32) * 0.1,
        "b1": jax.random.normal(k2, (H,), dtype=jnp.float32) * 0.1,
        "w2": jax.random.normal(k3, (H, 1), dtype=jnp.float32) * 0.1,
        "b2": jax.random.normal(k4, (1,), dtype=jnp.float32) * 0.1,
        "gate": jax.random.normal(k5, (1,), dtype=jnp.float32) * 0.3,
    }

    out = biased_sigmoid(X, N, params)
    out = jax.block_until_ready(out)

    ref = biased_sigmoid_ref(X, N, params)
    assert out.shape == (B, Npad, Npad)
    assert jnp.allclose(out, ref, rtol=1e-5, atol=2e-5), "Pallas output mismatch vs reference"

    print("KERNEL_OK")
</pallas_src>

<mosaic_0001>
module attributes {stable_mosaic.version = 11 : i64} {
  func.func @_biased_sigmoid_kernel(%arg0: i32, %arg1: memref<2xi32, #tpu.memory_space<smem>>, %arg2: memref<2xf32, #tpu.memory_space<smem>>, %arg3: memref<1x128x32xf32, #tpu.memory_space<vmem>>, %arg4: memref<1x32x128xf32, #tpu.memory_space<vmem>>, %arg5: memref<1x128x128xf32, #tpu.memory_space<vmem>>) attributes {dimension_semantics = [#tpu.dimension_semantics<parallel>], iteration_bounds = array<i64: 2>, scalar_prefetch = 2 : i64, scratch_operands = 0 : i64, tpu.core_type = #tpu.core_type<tc>, window_params = [{transform_indices = @transform_0, window_bounds = array<i64: 1, 128, 32>}, {transform_indices = @transform_1, window_bounds = array<i64: 1, 32, 128>}, {transform_indices = @transform_2, window_bounds = array<i64: 1, 128, 128>}]} {
    %0 = tpu.iota {dimensions = array<i32: 0>} : vector<128x1xi32>
    %1 = tpu.iota {dimensions = array<i32: 1>} : vector<1x128xi32>
    %2 = vector.broadcast %0 : vector<128x1xi32> to vector<128x128xi32>
    %3 = vector.broadcast %1 : vector<1x128xi32> to vector<128x128xi32>
    %4 = arith.cmpi ne, %2, %3 : vector<128x128xi32>
    %c1_i32 = arith.constant 1 : i32
    %5 = arith.muli %arg0, %c1_i32 : i32
    %c0_i32 = arith.constant 0 : i32
    %6 = arith.addi %5, %c0_i32 : i32
    %7 = arith.index_cast %6 : i32 to index
    %8 = memref.load %arg1[%7] : memref<2xi32, #tpu.memory_space<smem>>
    %c1_i32_0 = arith.constant 1 : i32
    %9 = arith.muli %arg0, %c1_i32_0 : i32
    %c0_i32_1 = arith.constant 0 : i32
    %10 = arith.addi %9, %c0_i32_1 : i32
    %11 = arith.index_cast %10 : i32 to index
    %12 = memref.load %arg2[%11] : memref<2xf32, #tpu.memory_space<smem>>
    %c0 = arith.constant 0 : index
    %c0_2 = arith.constant 0 : index
    %c0_3 = arith.constant 0 : index
    %13 = vector.load %arg3[%c0, %c0_2, %c0_3] : memref<1x128x32xf32, #tpu.memory_space<vmem>>, vector<1x128x32xf32>
    %14 = vector.shape_cast %13 : vector<1x128x32xf32> to vector<128x32xf32>
    %c0_4 = arith.constant 0 : index
    %c0_5 = arith.constant 0 : index
    %c0_6 = arith.constant 0 : index
    %15 = vector.load %arg4[%c0_4, %c0_5, %c0_6] : memref<1x32x128xf32, #tpu.memory_space<vmem>>, vector<1x32x128xf32>
    %16 = vector.shape_cast %15 : vector<1x32x128xf32> to vector<32x128xf32>
    %cst = arith.constant dense<0.000000e+00> : vector<128x128xf32>
    %17 = tpu.matmul %14, %16, %cst {dimension_numbers = #tpu.dot_dimension_numbers<[1], [0], [0], [1], [0, 0, 1, 1], [], []>} : vector<128x32xf32>, vector<32x128xf32>, vector<128x128xf32> -> vector<128x128xf32>
    %cst_7 = arith.constant 0.000000e+00 : f32
    %18 = vector.broadcast %cst_7 : f32 to vector<128x128xf32>
    %19 = arith.select %4, %17, %18 : vector<128x128xi1>, vector<128x128xf32>
    %20 = vector.broadcast %8 : i32 to vector<1x128xi32>
    %21 = arith.cmpi slt, %1, %20 : vector<1x128xi32>
    %22 = vector.broadcast %8 : i32 to vector<128x1xi32>
    %23 = arith.cmpi slt, %0, %22 : vector<128x1xi32>
    %cst_8 = arith.constant 0xFF800000 : f32
    %24 = vector.shape_cast %21 : vector<1x128xi1> to vector<1x128xi1>
    %25 = vector.broadcast %24 : vector<1x128xi1> to vector<128x128xi1>
    %26 = vector.broadcast %cst_8 : f32 to vector<128x128xf32>
    %27 = arith.select %25, %19, %26 : vector<128x128xi1>, vector<128x128xf32>
    %cst_9 = arith.constant dense<0xFF800000> : vector<128xf32>
    %28 = vector.multi_reduction <maximumf>, %27, %cst_9 [1] : vector<128x128xf32> to vector<128xf32>
    %29 = vector.shape_cast %28 : vector<128xf32> to vector<128x1xf32>
    %cst_10 = arith.constant 0x7F800000 : f32
    %30 = vector.shape_cast %21 : vector<1x128xi1> to vector<1x128xi1>
    %31 = vector.broadcast %30 : vector<1x128xi1> to vector<128x128xi1>
    %32 = vector.broadcast %cst_10 : f32 to vector<128x128xf32>
    %33 = arith.select %31, %19, %32 : vector<128x128xi1>, vector<128x128xf32>
    %cst_11 = arith.constant dense<0x7F800000> : vector<128xf32>
    %34 = vector.multi_reduction <minimumf>, %33, %cst_11 [1] : vector<128x128xf32> to vector<128xf32>
    %35 = vector.shape_cast %34 : vector<128xf32> to vector<128x1xf32>
    %cst_12 = arith.constant 0xFF800000 : f32
    %36 = vector.broadcast %cst_12 : f32 to vector<128x1xf32>
    %37 = arith.select %23, %29, %36 : vector<128x1xi1>, vector<128x1xf32>
    %cst_13 = arith.constant dense<0xFF800000> : vector<1xf32>
    %38 = vector.multi_reduction <maximumf>, %37, %cst_13 [0] : vector<128x1xf32> to vector<1xf32>
    %39 = vector.shape_cast %38 : vector<1xf32> to vector<1x1xf32>
    %cst_14 = arith.constant 0.000000e+00 : f32
    %40 = vector.broadcast %cst_14 : f32 to vector<1x1xf32>
    %41 = arith.maximumf %39, %40 : vector<1x1xf32>
    %cst_15 = arith.constant 0x7F800000 : f32
    %42 = vector.broadcast %cst_15 : f32 to vector<128x1xf32>
    %43 = arith.select %23, %35, %42 : vector<128x1xi1>, vector<128x1xf32>
    %cst_16 = arith.constant dense<0x7F800000> : vector<1xf32>
    %44 = vector.multi_reduction <minimumf>, %43, %cst_16 [0] : vector<128x1xf32> to vector<1xf32>
    %45 = vector.shape_cast %44 : vector<1xf32> to vector<1x1xf32>
    %cst_17 = arith.constant 0.000000e+00 : f32
    %46 = vector.broadcast %cst_17 : f32 to vector<1x1xf32>
    %47 = arith.minimumf %45, %46 : vector<1x1xf32>
    %cst_18 = arith.constant 3.125000e-02 : f32
    %48 = vector.broadcast %cst_18 : f32 to vector<1x1xf32>
    %49 = arith.mulf %41, %48 : vector<1x1xf32>
    %cst_19 = arith.constant 3.125000e-02 : f32
    %50 = vector.broadcast %cst_19 : f32 to vector<1x1xf32>
    %51 = arith.mulf %47, %50 : vector<1x1xf32>
    %52 = arith.subf %49, %51 : vector<1x1xf32>
    %cst_20 = arith.constant 9.99999974E-6 : f32
    %53 = vector.broadcast %cst_20 : f32 to vector<1x1xf32>
    %54 = arith.addf %52, %53 : vector<1x1xf32>
    %cst_21 = arith.constant 1.000000e+01 : f32
    %55 = vector.broadcast %cst_21 : f32 to vector<1x1xf32>
    %56 = arith.divf %55, %54 : vector<1x1xf32>
    %cst_22 = arith.constant 0.000000e+00 : f32
    %57 = vector.broadcast %cst_22 : f32 to vector<1x1xf32>
    %58 = arith.subf %57, %51 : vector<1x1xf32>
    %59 = arith.mulf %58, %56 : vector<1x1xf32>
    %cst_23 = arith.constant 5.000000e+00 : f32
    %60 = vector.broadcast %cst_23 : f32 to vector<1x1xf32>
    %61 = arith.subf %59, %60 : vector<1x1xf32>
    %62 = vector.broadcast %12 : f32 to vector<1x1xf32>
    %63 = arith.addf %61, %62 : vector<1x1xf32>
    %cst_24 = arith.constant 1.562500e-02 : f32
    %64 = vector.broadcast %cst_24 : f32 to vector<1x1xf32>
    %65 = arith.mulf %64, %56 : vector<1x1xf32>
    %cst_25 = arith.constant 5.000000e-01 : f32
    %66 = vector.broadcast %cst_25 : f32 to vector<1x1xf32>
    %67 = arith.mulf %66, %63 : vector<1x1xf32>
    %68 = vector.broadcast %65 : vector<1x1xf32> to vector<128x128xf32>
    %69 = arith.mulf %19, %68 : vector<128x128xf32>
    %70 = vector.broadcast %67 : vector<1x1xf32> to vector<128x128xf32>
    %71 = arith.addf %69, %70 : vector<128x128xf32>
    %72 = math.tanh %71 : vector<128x128xf32>
    %cst_26 = arith.constant 5.000000e-01 : f32
    %73 = vector.broadcast %cst_26 : f32 to vector<128x128xf32>
    %74 = arith.mulf %73, %72 : vector<128x128xf32>
    %cst_27 = arith.constant 5.000000e-01 : f32
    %75 = vector.broadcast %cst_27 : f32 to vector<128x128xf32>
    %76 = arith.addf %74, %75 : vector<128x128xf32>
    %cst_28 = arith.constant 0.000000e+00 : f32
    %77 = vector.broadcast %cst_28 : f32 to vector<128x128xf32>
    %78 = arith.select %4, %76, %77 : vector<128x128xi1>, vector<128x128xf32>
    %c0_29 = arith.constant 0 : index
    %c0_30 = arith.constant 0 : index
    %c0_31 = arith.constant 0 : index
    %79 = vector.load %arg5[%c0_29, %c0_30, %c0_31] : memref<1x128x128xf32, #tpu.memory_space<vmem>>, vector<1x128x128xf32>
    %80 = vector.shape_cast %79 : vector<1x128x128xf32> to vector<128x128xf32>
    %81 = vector.shape_cast %78 : vector<128x128xf32> to vector<1x128x128xf32>
    tpu.vector_store %arg5[%c0_29, %c0_30, %c0_31], %81 {strides = array<i32>} : memref<1x128x128xf32, #tpu.memory_space<vmem>>, vector<1x128x128xf32>,
    return
  }
  func.func @transform_0(%arg0: i32, %arg1: memref<2xi32, #tpu.memory_space<smem>>, %arg2: memref<2xf32, #tpu.memory_space<smem>>) -> (i32, i32, i32) {
    %c0_i32 = arith.constant 0 : i32
    %c0_i32_0 = arith.constant 0 : i32
    %c0_i32_1 = arith.constant 0 : i32
    return %arg0, %c0_i32, %c0_i32_0 : i32, i32, i32
  }
  func.func @transform_1(%arg0: i32, %arg1: memref<2xi32, #tpu.memory_space<smem>>, %arg2: memref<2xf32, #tpu.memory_space<smem>>) -> (i32, i32, i32) {
    %c0_i32 = arith.constant 0 : i32
    %c0_i32_0 = arith.constant 0 : i32
    %c0_i32_1 = arith.constant 0 : i32
    return %arg0, %c0_i32, %c0_i32_0 : i32, i32, i32
  }
  func.func @transform_2(%arg0: i32, %arg1: memref<2xi32, #tpu.memory_space<smem>>, %arg2: memref<2xf32, #tpu.memory_space<smem>>) -> (i32, i32, i32) {
    %c0_i32 = arith.constant 0 : i32
    %c0_i32_0 = arith.constant 0 : i32
    %c0_i32_1 = arith.constant 0 : i32
    return %arg0, %c0_i32, %c0_i32_0 : i32, i32, i32
  }
}

</mosaic_0001>

<llo_original>
// kernel: tpu_custom_call.1
$region0: #{tpu_custom_call.1}
  #allocation0 [shape = 'u32[]', space=smem, size = 0x4, offset = 0x4, fixed_abs, tag = 'smem constant byte address 0x4 - core index']
  #allocation1 [shape = 'u32[144,128]{1,0:T(1,128)}', space=vmem, size = 0x12000, scoped, tag = 'internal scratch']
  #allocation2 [shape = 's32[1]{0}', space=sflag, size = 0x4, scoped, tag = 'scoped memory for tpu_custom_call.1']
  #allocation3 [shape = 'u8[512]{0}', space=smem, size = 0x200, scoped, tag = 'prefetched SMEM operand 0']
  #allocation4 [shape = 'u8[512]{0}', space=smem, size = 0x200, scoped, tag = 'prefetched SMEM operand 1']
  %s0 = inlined_call_operand.vmem [shape: s32[2], index: 0, kind: input, shape index: {}]
  %s1 = inlined_call_operand.vmem [shape: f32[2], index: 1, kind: input, shape index: {}]
  %s2 = inlined_call_operand.vmem [shape: f32[2,128,32], index: 2, kind: input, shape index: {}]
  %s3 = inlined_call_operand.vmem [shape: f32[2,32,128], index: 3, kind: input, shape index: {}]
  %s4 = inlined_call_operand.hbm [shape: f32[2,128,128], index: 4, kind: output, shape index: {}]
  %s5 = sld [smem:[#allocation0]]
  $region41: #{tpu_custom_call.1} parent=0
    _
  %s7 = ssub.s32 1, %s5
  %s8 = scalar_select 0, %s7, %s5
  %s9 = sshll.u32 %s0, 4
  %s10 = int_to_ptr.vmem [resolvable:$true] %s9
  %12 = dma.vmem_to_smem %s10, 16, [#allocation3], [#allocation2]
  %s13 = sshll.u32 %s1, 4
  %s14 = int_to_ptr.vmem [resolvable:$true] %s13
  %16 = dma.vmem_to_smem %s14, 16, [#allocation4], [#allocation2]
  %17 = dma.done [#allocation2], 32
  %18 = sfence
  $region1: #{tpu_custom_call.1} parent=0
    #allocation5 [shape = 'u8[131072]{0}', space=vmem, size = 0x20000, scoped, tag = 'output window, operand 0']
    #allocation6 [shape = 's32[2]{0}', space=sflag, size = 0x8, scoped, tag = 'scoped memory for tpu_custom_call.1']
    %19 = vsyncpa [#allocation6], 0
    %s20 = scalar_lea.sflag [#allocation6], 1
    %21 = vsyncpa %s20, 0
    loop: start=0, step=1, limit=4
    $region2: #{tpu_custom_call.1} parent=1 // loop_pre_header
      _
    $region3: #{tpu_custom_call.1} parent=1 // loop_header
      %s23 = sphi 0, %s27
      %p24 = scmp.ge.s32.totalorder %s23, 4
      %s33 = sphi 0, %s35
      %s36 = sphi 0, %s33
      %s37 = sphi 0, %s36
      %s53 = sphi 0, %s37
      %s59 = sphi 0, %s61
      %s62 = sphi 0, %s59
      %s63 = sphi 0, %s62
      %s79 = sphi 0, %s63
      %s85 = sphi 0, %s87
      %s88 = sphi 0, %s85
      %s89 = sphi 0, %s88
      %s105 = sphi 0, %s89
    $region4: #{tpu_custom_call.1} parent=1 // loop_header_branch
      %26 = sbr.rel (%p24) target = $region8
    $region5: #{tpu_custom_call.1} parent=1 // loop_body
      %s28 = ssub.s32 %s23, 1
      %s29 = ssub.s32 %s23, 2
      %s30 = sadd.s32 %s23, 1
      %s31 = ssub.s32 %s23, %s30
      %p32 = scmp.eq.s32.totalorder %s31, 0
      %s34 = sadd.s32 %s33, 1
      %s35 = scalar_select %p32, %s33, %s34
      %p38 = pneg %p32
      %p39 = scmp.eq.s32.totalorder %s23, 1
      %p40 = por %p38, %p39
      %p41 = scmp.ne.s32.totalorder %s33, %s36
      %p42 = scmp.eq.s32.totalorder %s23, 0
      %p43 = por %p41, %p42
      %p44 = scmp.ne.s32.totalorder %s33, %s36
      %p45 = scmp.eq.s32.totalorder %s28, 1
      %p46 = por %p44, %p45
      %p47 = scmp.ne.s32.totalorder %s36, %s37
      %p48 = scmp.eq.s32.totalorder %s28, 0
      %p49 = por %p47, %p48
      %p50 = scmp.ne.s32.totalorder %s36, %s37
      %p51 = scmp.eq.s32.totalorder %s29, 1
      %p52 = por %p50, %p51
      %p54 = scmp.ne.s32.totalorder %s37, %s53
      %p55 = scmp.eq.s32.totalorder %s29, 0
      %p56 = por %p54, %p55
      %s57 = ssub.s32 %s23, %s30
      %p58 = scmp.eq.s32.totalorder %s57, 0
      %s60 = sadd.s32 %s59, 1
      %s61 = scalar_select %p58, %s59, %s60
      %p64 = pneg %p58
      %p65 = scmp.eq.s32.totalorder %s23, 1
      %p66 = por %p64, %p65
      %p67 = scmp.ne.s32.totalorder %s59, %s62
      %p68 = scmp.eq.s32.totalorder %s23, 0
      %p69 = por %p67, %p68
      %p70 = scmp.ne.s32.totalorder %s59, %s62
      %p71 = scmp.eq.s32.totalorder %s28, 1
      %p72 = por %p70, %p71
      %p73 = scmp.ne.s32.totalorder %s62, %s63
      %p74 = scmp.eq.s32.totalorder %s28, 0
      %p75 = por %p73, %p74
      %p76 = scmp.ne.s32.totalorder %s62, %s63
      %p77 = scmp.eq.s32.totalorder %s29, 1
      %p78 = por %p76, %p77
      %p80 = scmp.ne.s32.totalorder %s63, %s79
      %p81 = scmp.eq.s32.totalorder %s29, 0
      %p82 = por %p80, %p81
      %s83 = ssub.s32 %s23, %s30
      %p84 = scmp.eq.s32.totalorder %s83, 0
      %s86 = sadd.s32 %s85, 1
      %s87 = scalar_select %p84, %s85, %s86
      %p90 = pneg %p84
      %p91 = scmp.eq.s32.totalorder %s23, 1
      %p92 = por %p90, %p91
      %p93 = scmp.ne.s32.totalorder %s85, %s88
      %p94 = scmp.eq.s32.totalorder %s23, 0
      %p95 = por %p93, %p94
      %p96 = scmp.ne.s32.totalorder %s85, %s88
      %p97 = scmp.eq.s32.totalorder %s28, 1
      %p98 = por %p96, %p97
      %p99 = scmp.ne.s32.totalorder %s88, %s89
      %p100 = scmp.eq.s32.totalorder %s28, 0
      %p101 = por %p99, %p100
      %p102 = scmp.ne.s32.totalorder %s88, %s89
      %p103 = scmp.eq.s32.totalorder %s29, 1
      %p104 = por %p102, %p103
      %p106 = scmp.ne.s32.totalorder %s89, %s105
      %p107 = scmp.eq.s32.totalorder %s29, 0
      %p108 = por %p106, %p107
      %p109 = scmp.le.s32.totalorder 1, %s23
      %p110 = scmp.lt.s32.totalorder %s23, 3
      %p111 = pnand %p109, %p110
      %p112 = pneg %p111
      // Predicated region
      $region9: #{tpu_custom_call.1} parent=5 // pred_check
        _
      $region10: #{tpu_custom_call.1} parent=5 // pred_check_branch
        %114 = sbr.rel (%p111) target = $region12
      $region11: #{tpu_custom_call.1} parent=5 // pred_region
        %s115 = ssub.s32 %s23, 1
      $region12: #{tpu_custom_call.1} parent=5 // pred_fallthru
        _
      %p116 = scmp.lt.s32.totalorder %s23, 2
      // Predicated region
      $region13: #{tpu_custom_call.1} parent=5 // pred_check
        %p117 = pneg %p116
      $region14: #{tpu_custom_call.1} parent=5 // pred_check_branch
        %119 = sbr.rel (%p117) target = $region16
      $region15: #{tpu_custom_call.1} parent=5 // pred_region
        // Predicated region
        $region17: #{tpu_custom_call.1} parent=15 // pred_check
          %p120 = pneg %p43
        $region18: #{tpu_custom_call.1} parent=15 // pred_check_branch
          %122 = sbr.rel (%p120) target = $region20
        $region19: #{tpu_custom_call.1} parent=15 // pred_region
          %p123 = scmp.lt.s32.totalorder %s23, 1
          %s124 = scalar_select %p123, %s23, 1
          %s125 = smul.addr %s124, 16
          %s126 = smul.addr %s125, 8
          %s127 = scalar_lea.vmem %s2, %s126
        $region20: #{tpu_custom_call.1} parent=15 // pred_fallthru
          _
        // Predicated region
        $region21: #{tpu_custom_call.1} parent=15 // pred_check
          %p128 = pneg %p69
        $region22: #{tpu_custom_call.1} parent=15 // pred_check_branch
          %130 = sbr.rel (%p128) target = $region24
        $region23: #{tpu_custom_call.1} parent=15 // pred_region
          %p131 = scmp.lt.s32.totalorder %s23, 1
          %s132 = scalar_select %p131, %s23, 1
          %s133 = smul.addr %s132, 4
          %s134 = smul.addr %s133, 8
          %s135 = scalar_lea.vmem %s3, %s134
        $region24: #{tpu_custom_call.1} parent=15 // pred_fallthru
          _
      $region16: #{tpu_custom_call.1} parent=5 // pred_fallthru
        _
      %p136 = scmp.le.s32.totalorder 1, %s23
      %p137 = scmp.lt.s32.totalorder %s23, 3
      %p138 = pnand %p136, %p137
      %p139 = pneg %p138
      // Predicated region
      $region25: #{tpu_custom_call.1} parent=5 // pred_check
        _
      $region26: #{tpu_custom_call.1} parent=5 // pred_check_branch
        %141 = sbr.rel (%p138) target = $region28
      $region27: #{tpu_custom_call.1} parent=5 // pred_region
        %s142 = ssub.s32 %s23, 1
        %p143 = scmp.lt.s32.totalorder %s28, 1
        %s144 = scalar_select %p143, %s28, 1
        %s145 = smul.addr %s144, 16
        %s146 = smul.addr %s145, 8
        %s147 = scalar_lea.vmem %s2, %s146
        %p148 = pneg %p49
        %p149 = pneg %p46
        %p150 = scmp.lt.s32.totalorder %s28, 1
        %s151 = scalar_select %p150, %s28, 1
        %s152 = smul.addr %s151, 4
        %s153 = smul.addr %s152, 8
        %s154 = scalar_lea.vmem %s3, %s153
        %p155 = pneg %p75
        %p156 = pneg %p72
        %p157 = pneg %p101
        %p158 = pneg %p98
        %s159 = sand.u32 %s88, 1
        %s160 = scalar_lea.sflag [#allocation6], %s159
        %s161 = sand.u32 %s88, 1
        %s162 = smul.addr %s161, 128
        %s163 = scalar_lea.vmem [#allocation5], %s162
        %p164 = scmp.lt.s32.totalorder %s28, 1
        %s165 = scalar_select %p164, %s28, 1
        %s166 = smul.addr %s165, 16
        %s167 = smul.addr %s166, 8
        %s168 = scalar_lea.vmem %s2, %s167
        %p169 = scmp.lt.s32.totalorder %s28, 1
        %s170 = scalar_select %p169, %s28, 1
        %s171 = smul.addr %s170, 4
        %s172 = smul.addr %s171, 8
        %s173 = scalar_lea.vmem %s3, %s172
        %v174 = vlaneseq
        %v175 = vshrl.u32 %v174, 7
        %v176 = vadd.s32 %v175, 8
        %v177 = vadd.s32 %v175, 16
        %v178 = vadd.s32 %v175, 24
        %v179 = vadd.s32 %v175, 32
        %v180 = vadd.s32 %v175, 40
        %v181 = vadd.s32 %v175, 48
        %v182 = vadd.s32 %v175, 56
        %v183 = vadd.s32 %v175, 64
        %v184 = vadd.s32 %v175, 72
        %v185 = vadd.s32 %v175, 80
        %v186 = vadd.s32 %v175, 88
        %v187 = vadd.s32 %v175, 96
        %v188 = vadd.s32 %v175, 104
        %v189 = vadd.s32 %v175, 112
        %v190 = vadd.s32 %v175, 120
        %v191 = vlaneseq
        %v192 = vand.u32 %v191, 127
        %vm193 = vcmp.ne.s32.totalorder %v175, %v192
        %vm194 = vcmp.ne.s32.totalorder %v176, %v192
        %vm195 = vcmp.ne.s32.totalorder %v177, %v192
        %vm196 = vcmp.ne.s32.totalorder %v178, %v192
        %vm197 = vcmp.ne.s32.totalorder %v179, %v192
        %vm198 = vcmp.ne.s32.totalorder %v180, %v192
        %vm199 = vcmp.ne.s32.totalorder %v181, %v192
        %vm200 = vcmp.ne.s32.totalorder %v182, %v192
        %vm201 = vcmp.ne.s32.totalorder %v183, %v192
        %vm202 = vcmp.ne.s32.totalorder %v184, %v192
        %vm203 = vcmp.ne.s32.totalorder %v185, %v192
        %vm204 = vcmp.ne.s32.totalorder %v186, %v192
        %vm205 = vcmp.ne.s32.totalorder %v187, %v192
        %vm206 = vcmp.ne.s32.totalorder %v188, %v192
        %vm207 = vcmp.ne.s32.totalorder %v189, %v192
        %vm208 = vcmp.ne.s32.totalorder %v190, %v192
        %s209 = sld [smem:[#allocation3 + %s28]]
        %s210 = sld [smem:[#allocation4 + %s28]]
        %v211 = vld [vmem:[%s168] sm:$0xff]
        %v212 = vld [vmem:[%s168 + $0x8] sm:$0xff]
        %v213 = vld [vmem:[%s168 + $0x10] sm:$0xff]
        %v214 = vld [vmem:[%s168 + $0x18] sm:$0xff]
        %v215 = vld [vmem:[%s168 + $0x20] sm:$0xff]
        %v216 = vld [vmem:[%s168 + $0x28] sm:$0xff]
        %v217 = vld [vmem:[%s168 + $0x30] sm:$0xff]
        %v218 = vld [vmem:[%s168 + $0x38] sm:$0xff]
        %v219 = vld [vmem:[%s168 + $0x40] sm:$0xff]
        %v220 = vld [vmem:[%s168 + $0x48] sm:$0xff]
        %v221 = vld [vmem:[%s168 + $0x50] sm:$0xff]
        %v222 = vld [vmem:[%s168 + $0x58] sm:$0xff]
        %v223 = vld [vmem:[%s168 + $0x60] sm:$0xff]
        %v224 = vld [vmem:[%s168 + $0x68] sm:$0xff]
        %v225 = vld [vmem:[%s168 + $0x70] sm:$0xff]
        %v226 = vld [vmem:[%s168 + $0x78] sm:$0xff]
        %v227 = vld [vmem:[%s173] sm:$0xff]
        %v228 = vld [vmem:[%s173 + $0x8] sm:$0xff]
        %v229 = vld [vmem:[%s173 + $0x10] sm:$0xff]
        %v230 = vld [vmem:[%s173 + $0x18] sm:$0xff]
        %vm231 = vcmask 261120
        %v233 = vsel %vm231, %v211, 0
        %v236 = vsel %vm231, %v212, 0
        %v239 = vsel %vm231, %v213, 0
        %v242 = vsel %vm231, %v214, 0
        %v245 = vsel %vm231, %v215, 0
        %v248 = vsel %vm231, %v216, 0
        %v251 = vsel %vm231, %v217, 0
        %v254 = vsel %vm231, %v218, 0
        %v257 = vsel %vm231, %v219, 0
        %v260 = vsel %vm231, %v220, 0
        %v263 = vsel %vm231, %v221, 0
        %v266 = vsel %vm231, %v222, 0
        %v269 = vsel %vm231, %v223, 0
        %v272 = vsel %vm231, %v224, 0
        %v275 = vsel %vm231, %v225, 0
        %v278 = vsel %vm231, %v226, 0
        %280 = vmatprep.subr.mxu0 0.0
        %281 = vmatpush1.msra.mxu0 %v227
        %282 = vmatprep.subr.mxu0 0.0
        %283 = vmatpush1.msra.mxu0 %v228
        %284 = vmatprep.subr.mxu0 0.0
        %285 = vmatpush1.msra.mxu0 %v229
        %286 = vmatprep.subr.mxu0 0.0
        %287 = vmatpush1.msra.mxu0 %v230
        %288 = vmatprep.subr.mxu0 0.0
        %289 = vmatpush1.msra.mxu0 0.0
        %290 = vmatprep.subr.mxu0 0.0
        %291 = vmatpush1.msra.mxu0 0.0
        %292 = vmatprep.subr.mxu0 0.0
        %293 = vmatpush1.msra.mxu0 0.0
        %294 = vmatprep.subr.mxu0 0.0
        %295 = vmatpush1.msra.mxu0 0.0
        %296 = vmatprep.subr.mxu0 0.0
        %297 = vmatpush1.msra.mxu0 0.0
        %298 = vmatprep.subr.mxu0 0.0
        %299 = vmatpush1.msra.mxu0 0.0
        %300 = vmatprep.subr.mxu0 0.0
        %301 = vmatpush1.msra.mxu0 0.0
        %302 = vmatprep.subr.mxu0 0.0
        %303 = vmatpush1.msra.mxu0 0.0
        %304 = vmatprep.subr.mxu0 0.0
        %305 = vmatpush1.msra.mxu0 0.0
        %306 = vmatprep.subr.mxu0 0.0
        %307 = vmatpush1.msra.mxu0 0.0
        %308 = vmatprep.subr.mxu0 0.0
        %309 = vmatpush1.msra.mxu0 0.0
        %310 = vmatprep.subr.mxu0 0.0
        %311 = vmatpush1.msra.mxu0 0.0
        %312 = vmatprep.subr.mxu0 0.0
        %313 = vmatpush1.msra.mxu0 0.0
        %314 = vmatprep.subr.mxu0 0.0
        %315 = vmatpush1.msra.mxu0 0.0
        %316 = vmatprep.subr.mxu0 0.0
        %317 = vmatpush1.msra.mxu0 0.0
        %318 = vmatprep.subr.mxu0 0.0
        %319 = vmatpush1.msra.mxu0 0.0
        %320 = vmatprep.subr.mxu0 0.0
        %321 = vmatpush1.msra.mxu0 0.0
        %322 = vmatprep.subr.mxu0 0.0
        %323 = vmatpush1.msra.mxu0 0.0
        %324 = vmatprep.subr.mxu0 0.0
        %325 = vmatpush1.msra.mxu0 0.0
        %326 = vmatprep.subr.mxu0 0.0
        %327 = vmatpush1.msra.mxu0 0.0
        %328 = vmatprep.subr.mxu0 0.0
        %329 = vmatpush1.msra.mxu0 0.0
        %330 = vmatprep.subr.mxu0 0.0
        %331 = vmatpush1.msra.mxu0 0.0
        %332 = vmatprep.subr.mxu0 0.0
        %333 = vmatpush1.msra.mxu0 0.0
        %334 = vmatprep.subr.mxu0 0.0
        %335 = vmatpush1.msra.mxu0 0.0
        %336 = vmatprep.subr.mxu0 0.0
        %337 = vmatpush1.msra.mxu0 0.0
        %338 = vmatprep.subr.mxu0 0.0
        %339 = vmatpush1.msra.mxu0 0.0
        %340 = vmatprep.subr.mxu0 0.0
        %341 = vmatpush1.msra.mxu0 0.0
        %342 = vmatprep.subr.mxu0 0.0
        %343 = vmatpush1.msra.mxu0 0.0
        %344 = vmatprep.mubr.f32.mxu0 0.0
        %345 = vmatmul.mubr.f32.gmra.mrb[0].mxu0 %v233
        %v346 = vpop.f32.mrb[0].mxu0
        %v347 = vadd.f32 0.0, %v346
        %v348 = vpop.f32.mrb[0].mxu0
        %349 = vmatprep.mubr.f32.mxu0 0.0
        %350 = vmatmul.mubr.f32.gmra.mrb[0].mxu0 %v236
        %v351 = vpop.f32.mrb[0].mxu0
        %v352 = vadd.f32 0.0, %v351
        %v353 = vpop.f32.mrb[0].mxu0
        %354 = vmatprep.mubr.f32.mxu0 0.0
        %355 = vmatmul.mubr.f32.gmra.mrb[0].mxu0 %v239
        %v356 = vpop.f32.mrb[0].mxu0
        %v357 = vadd.f32 0.0, %v356
        %v358 = vpop.f32.mrb[0].mxu0
        %359 = vmatprep.mubr.f32.mxu0 0.0
        %360 = vmatmul.mubr.f32.gmra.mrb[0].mxu0 %v242
        %v361 = vpop.f32.mrb[0].mxu0
        %v362 = vadd.f32 0.0, %v361
        %v363 = vpop.f32.mrb[0].mxu0
        %364 = vmatprep.mubr.f32.mxu0 0.0
        %365 = vmatmul.mubr.f32.gmra.mrb[0].mxu0 %v245
        %v366 = vpop.f32.mrb[0].mxu0
        %v367 = vadd.f32 0.0, %v366
        %v368 = vpop.f32.mrb[0].mxu0
        %369 = vmatprep.mubr.f32.mxu0 0.0
        %370 = vmatmul.mubr.f32.gmra.mrb[0].mxu0 %v248
        %v371 = vpop.f32.mrb[0].mxu0
        %v372 = vadd.f32 0.0, %v371
        %v373 = vpop.f32.mrb[0].mxu0
        %374 = vmatprep.mubr.f32.mxu0 0.0
        %375 = vmatmul.mubr.f32.gmra.mrb[0].mxu0 %v251
        %v376 = vpop.f32.mrb[0].mxu0
        %v377 = vadd.f32 0.0, %v376
        %v378 = vpop.f32.mrb[0].mxu0
        %379 = vmatprep.mubr.f32.mxu0 0.0
        %380 = vmatmul.mubr.f32.gmra.mrb[0].mxu0 %v254
        %v381 = vpop.f32.mrb[0].mxu0
        %v382 = vadd.f32 0.0, %v381
        %v383 = vpop.f32.mrb[0].mxu0
        %384 = vmatprep.mubr.f32.mxu0 0.0
        %385 = vmatmul.mubr.f32.gmra.mrb[0].mxu0 %v257
        %v386 = vpop.f32.mrb[0].mxu0
        %v387 = vadd.f32 0.0, %v386
        %v388 = vpop.f32.mrb[0].mxu0
        %389 = vmatprep.mubr.f32.mxu0 0.0
        %390 = vmatmul.mubr.f32.gmra.mrb[0].mxu0 %v260
        %v391 = vpop.f32.mrb[0].mxu0
        %v392 = vadd.f32 0.0, %v391
        %v393 = vpop.f32.mrb[0].mxu0
        %394 = vmatprep.mubr.f32.mxu0 0.0
        %395 = vmatmul.mubr.f32.gmra.mrb[0].mxu0 %v263
        %v396 = vpop.f32.mrb[0].mxu0
        %v397 = vadd.f32 0.0, %v396
        %v398 = vpop.f32.mrb[0].mxu0
        %399 = vmatprep.mubr.f32.mxu0 0.0
        %400 = vmatmul.mubr.f32.gmra.mrb[0].mxu0 %v266
        %v401 = vpop.f32.mrb[0].mxu0
        %v402 = vadd.f32 0.0, %v401
        %v403 = vpop.f32.mrb[0].mxu0
        %404 = vmatprep.mubr.f32.mxu0 0.0
        %405 = vmatmul.mubr.f32.gmra.mrb[0].mxu0 %v269
        %v406 = vpop.f32.mrb[0].mxu0
        %v407 = vadd.f32 0.0, %v406
        %v408 = vpop.f32.mrb[0].mxu0
        %409 = vmatprep.mubr.f32.mxu0 0.0
        %410 = vmatmul.mubr.f32.gmra.mrb[0].mxu0 %v272
        %v411 = vpop.f32.mrb[0].mxu0
        %v412 = vadd.f32 0.0, %v411
        %v413 = vpop.f32.mrb[0].mxu0
        %414 = vmatprep.mubr.f32.mxu0 0.0
        %415 = vmatmul.mubr.f32.gmra.mrb[0].mxu0 %v275
        %v416 = vpop.f32.mrb[0].mxu0
        %v417 = vadd.f32 0.0, %v416
        %v418 = vpop.f32.mrb[0].mxu0
        %419 = vmatprep.mubr.f32.mxu0 0.0
        %420 = vmatmul.mubr.f32.gmra.mrb[0].mxu0 %v278
        %v421 = vpop.f32.mrb[0].mxu0
        %v422 = vadd.f32 0.0, %v421
        %v423 = vpop.f32.mrb[0].mxu0
        %424 = vdwg.mxu0
        %v425 = vsel %vm193, %v347, 0.0
        %v426 = vsel %vm194, %v352, 0.0
        %v427 = vsel %vm195, %v357, 0.0
        %v428 = vsel %vm196, %v362, 0.0
        %v429 = vsel %vm197, %v367, 0.0
        %v430 = vsel %vm198, %v372, 0.0
        %v431 = vsel %vm199, %v377, 0.0
        %v432 = vsel %vm200, %v382, 0.0
        %v433 = vsel %vm201, %v387, 0.0
        %v434 = vsel %vm202, %v392, 0.0
        %v435 = vsel %vm203, %v397, 0.0
        %v436 = vsel %vm204, %v402, 0.0
        %v437 = vsel %vm205, %v407, 0.0
        %v438 = vsel %vm206, %v412, 0.0
        %v439 = vsel %vm207, %v417, 0.0
        %v440 = vsel %vm208, %v422, 0.0
        %v441 = vstv %s209
        %vm442 = vcmp.lt.s32.totalorder %v192, %v441
        %vm443 = vcmp.lt.s32.totalorder %v175, %v441
        %vm444 = vcmp.lt.s32.totalorder %v176, %v441
        %vm445 = vcmp.lt.s32.totalorder %v177, %v441
        %vm446 = vcmp.lt.s32.totalorder %v178, %v441
        %vm447 = vcmp.lt.s32.totalorder %v179, %v441
        %vm448 = vcmp.lt.s32.totalorder %v180, %v441
        %vm449 = vcmp.lt.s32.totalorder %v181, %v441
        %vm450 = vcmp.lt.s32.totalorder %v182, %v441
        %vm451 = vcmp.lt.s32.totalorder %v183, %v441
        %vm452 = vcmp.lt.s32.totalorder %v184, %v441
        %vm453 = vcmp.lt.s32.totalorder %v185, %v441
        %vm454 = vcmp.lt.s32.totalorder %v186, %v441
        %vm455 = vcmp.lt.s32.totalorder %v187, %v441
        %vm456 = vcmp.lt.s32.totalorder %v188, %v441
        %vm457 = vcmp.lt.s32.totalorder %v189, %v441
        %vm458 = vcmp.lt.s32.totalorder %v190, %v441
        %v459 = vsel %vm442, 1, 0
        %vm460 = vcmp.eq.s32.totalorder %v459, 1
        %v461 = vsel %vm460, %v425, -inf
        %v462 = vsel %vm460, %v426, -inf
        %v463 = vsel %vm460, %v427, -inf
        %v464 = vsel %vm460, %v428, -inf
        %v465 = vsel %vm460, %v429, -inf
        %v466 = vsel %vm460, %v430, -inf
        %v467 = vsel %vm460, %v431, -inf
        %v468 = vsel %vm460, %v432, -inf
        %v469 = vsel %vm460, %v433, -inf
        %v470 = vsel %vm460, %v434, -inf
        %v471 = vsel %vm460, %v435, -inf
        %v472 = vsel %vm460, %v436, -inf
        %v473 = vsel %vm460, %v437, -inf
        %v474 = vsel %vm460, %v438, -inf
        %v475 = vsel %vm460, %v439, -inf
        %v476 = vsel %vm460, %v440, -inf
        %477 = vmax.xlane.f32.xlu0 %v461
        %v478 = vpop.xlane.xlu0 %477
        %479 = vmax.xlane.f32.xlu0 %v462
        %v480 = vpop.xlane.xlu0 %479
        %481 = vmax.xlane.f32.xlu0 %v463
        %v482 = vpop.xlane.xlu0 %481
        %483 = vmax.xlane.f32.xlu0 %v464
        %v484 = vpop.xlane.xlu0 %483
        %485 = vmax.xlane.f32.xlu0 %v465
        %v486 = vpop.xlane.xlu0 %485
        %487 = vmax.xlane.f32.xlu0 %v466
        %v488 = vpop.xlane.xlu0 %487
        %489 = vmax.xlane.f32.xlu0 %v467
        %v490 = vpop.xlane.xlu0 %489
        %491 = vmax.xlane.f32.xlu0 %v468
        %v492 = vpop.xlane.xlu0 %491
        %493 = vmax.xlane.f32.xlu0 %v469
        %v494 = vpop.xlane.xlu0 %493
        %495 = vmax.xlane.f32.xlu0 %v470
        %v496 = vpop.xlane.xlu0 %495
        %497 = vmax.xlane.f32.xlu0 %v471
        %v498 = vpop.xlane.xlu0 %497
        %499 = vmax.xlane.f32.xlu0 %v472
        %v500 = vpop.xlane.xlu0 %499
        %501 = vmax.xlane.f32.xlu0 %v473
        %v502 = vpop.xlane.xlu0 %501
        %503 = vmax.xlane.f32.xlu0 %v474
        %v504 = vpop.xlane.xlu0 %503
        %505 = vmax.xlane.f32.xlu0 %v475
        %v506 = vpop.xlane.xlu0 %505
        %507 = vmax.xlane.f32.xlu0 %v476
        %v508 = vpop.xlane.xlu0 %507
        %v509 = vsel %vm460, %v425, inf
        %v510 = vsel %vm460, %v426, inf
        %v511 = vsel %vm460, %v427, inf
        %v512 = vsel %vm460, %v428, inf
        %v513 = vsel %vm460, %v429, inf
        %v514 = vsel %vm460, %v430, inf
        %v515 = vsel %vm460, %v431, inf
        %v516 = vsel %vm460, %v432, inf
        %v517 = vsel %vm460, %v433, inf
        %v518 = vsel %vm460, %v434, inf
        %v519 = vsel %vm460, %v435, inf
        %v520 = vsel %vm460, %v436, inf
        %v521 = vsel %vm460, %v437, inf
        %v522 = vsel %vm460, %v438, inf
        %v523 = vsel %vm460, %v439, inf
        %v524 = vsel %vm460, %v440, inf
        %525 = vmin.xlane.f32.xlu0 %v509
        %v526 = vpop.xlane.xlu0 %525
        %527 = vmin.xlane.f32.xlu0 %v510
        %v528 = vpop.xlane.xlu0 %527
        %529 = vmin.xlane.f32.xlu0 %v511
        %v530 = vpop.xlane.xlu0 %529
        %531 = vmin.xlane.f32.xlu0 %v512
        %v532 = vpop.xlane.xlu0 %531
        %533 = vmin.xlane.f32.xlu0 %v513
        %v534 = vpop.xlane.xlu0 %533
        %535 = vmin.xlane.f32.xlu0 %v514
        %v536 = vpop.xlane.xlu0 %535
        %537 = vmin.xlane.f32.xlu0 %v515
        %v538 = vpop.xlane.xlu0 %537
        %539 = vmin.xlane.f32.xlu0 %v516
        %v540 = vpop.xlane.xlu0 %539
        %541 = vmin.xlane.f32.xlu0 %v517
        %v542 = vpop.xlane.xlu0 %541
        %543 = vmin.xlane.f32.xlu0 %v518
        %v544 = vpop.xlane.xlu0 %543
        %545 = vmin.xlane.f32.xlu0 %v519
        %v546 = vpop.xlane.xlu0 %545
        %547 = vmin.xlane.f32.xlu0 %v520
        %v548 = vpop.xlane.xlu0 %547
        %549 = vmin.xlane.f32.xlu0 %v521
        %v550 = vpop.xlane.xlu0 %549
        %551 = vmin.xlane.f32.xlu0 %v522
        %v552 = vpop.xlane.xlu0 %551
        %553 = vmin.xlane.f32.xlu0 %v523
        %v554 = vpop.xlane.xlu0 %553
        %555 = vmin.xlane.f32.xlu0 %v524
        %v556 = vpop.xlane.xlu0 %555
        %v557 = vsel %vm443, %v478, -inf
        %v558 = vsel %vm444, %v480, -inf
        %v559 = vsel %vm445, %v482, -inf
        %v560 = vsel %vm446, %v484, -inf
        %v561 = vsel %vm447, %v486, -inf
        %v562 = vsel %vm448, %v488, -inf
        %v563 = vsel %vm449, %v490, -inf
        %v564 = vsel %vm450, %v492, -inf
        %v565 = vsel %vm451, %v494, -inf
        %v566 = vsel %vm452, %v496, -inf
        %v567 = vsel %vm453, %v498, -inf
        %v568 = vsel %vm454, %v500, -inf
        %v569 = vsel %vm455, %v502, -inf
        %v570 = vsel %vm456, %v504, -inf
        %v571 = vsel %vm457, %v506, -inf
        %v572 = vsel %vm458, %v508, -inf
        %v573 = vmax.f32 %v557, %v561
        %v574 = vmax.f32 %v558, %v562
        %v575 = vmax.f32 %v559, %v563
        %v576 = vmax.f32 %v560, %v564
        %v577 = vmax.f32 %v573, %v565
        %v578 = vmax.f32 %v574, %v566
        %v579 = vmax.f32 %v575, %v567
        %v580 = vmax.f32 %v576, %v568
        %v581 = vmax.f32 %v577, %v569
        %v582 = vmax.f32 %v578, %v570
        %v583 = vmax.f32 %v579, %v571
        %v584 = vmax.f32 %v580, %v572
        %v585 = vmax.f32 %v581, %v582
        %v586 = vmax.f32 %v583, %v584
        %v587 = vmax.f32 %v585, %v586
        %v588 = vrot.slane %v587, 4
        %v589 = vmax.f32 %v587, %v588
        %v590 = vrot.slane %v589, 2
        %v591 = vmax.f32 %v589, %v590
        %v592 = vrot.slane %v591, 1
        %v593 = vmax.f32 %v591, %v592
        %v594 = vmax.f32 %v593, 0.0
        %v595 = vsel %vm443, %v526, inf
        %v596 = vsel %vm444, %v528, inf
        %v597 = vsel %vm445, %v530, inf
        %v598 = vsel %vm446, %v532, inf
        %v599 = vsel %vm447, %v534, inf
        %v600 = vsel %vm448, %v536, inf
        %v601 = vsel %vm449, %v538, inf
        %v602 = vsel %vm450, %v540, inf
        %v603 = vsel %vm451, %v542, inf
        %v604 = vsel %vm452, %v544, inf
        %v605 = vsel %vm453, %v546, inf
        %v606 = vsel %vm454, %v548, inf
        %v607 = vsel %vm455, %v550, inf
        %v608 = vsel %vm456, %v552, inf
        %v609 = vsel %vm457, %v554, inf
        %v610 = vsel %vm458, %v556, inf
        %v611 = vmin.f32 %v595, %v599
        %v612 = vmin.f32 %v596, %v600
        %v613 = vmin.f32 %v597, %v601
        %v614 = vmin.f32 %v598, %v602
        %v615 = vmin.f32 %v611, %v603
        %v616 = vmin.f32 %v612, %v604
        %v617 = vmin.f32 %v613, %v605
        %v618 = vmin.f32 %v614, %v606
        %v619 = vmin.f32 %v615, %v607
        %v620 = vmin.f32 %v616, %v608
        %v621 = vmin.f32 %v617, %v609
        %v622 = vmin.f32 %v618, %v610
        %v623 = vmin.f32 %v619, %v620
        %v624 = vmin.f32 %v621, %v622
        %v625 = vmin.f32 %v623, %v624
        %v626 = vrot.slane %v625, 4
        %v627 = vmin.f32 %v625, %v626
        %v628 = vrot.slane %v627, 2
        %v629 = vmin.f32 %v627, %v628
        %v630 = vrot.slane %v629, 1
        %v631 = vmin.f32 %v629, %v630
        %v632 = vmin.f32 %v631, 0.0
        %v633 = vmul.f32 %v594, 0.03125
        %v634 = vmul.f32 %v632, 0.03125
        %v635 = vsub.f32 %v633, %v634
        %v636 = vadd.f32 %v635, 1e-05
        %v637 = vrcp.pop %v636
        %v638 = vmul.f32 10.0, %v637
        %v639 = vsub.f32 0.0, %v634
        %v640 = vmul.f32 %v639, %v638
        %v641 = vsub.f32 %v640, 5.0
        %v642 = vstv %s210
        %v643 = vadd.f32 %v641, %v642
        %v644 = vmul.f32 %v638, 0.015625
        %v645 = vmul.f32 %v643, 0.5
        %v646 = vmul.f32 %v425, %v644
        %v647 = vmul.f32 %v426, %v644
        %v648 = vmul.f32 %v427, %v644
        %v649 = vmul.f32 %v428, %v644
        %v650 = vmul.f32 %v429, %v644
        %v651 = vmul.f32 %v430, %v644
        %v652 = vmul.f32 %v431, %v644
        %v653 = vmul.f32 %v432, %v644
        %v654 = vmul.f32 %v433, %v644
        %v655 = vmul.f32 %v434, %v644
        %v656 = vmul.f32 %v435, %v644
        %v657 = vmul.f32 %v436, %v644
        %v658 = vmul.f32 %v437, %v644
        %v659 = vmul.f32 %v438, %v644
        %v660 = vmul.f32 %v439, %v644
        %v661 = vmul.f32 %v440, %v644
        %v662 = vadd.f32 %v646, %v645
        %v663 = vadd.f32 %v647, %v645
        %v664 = vadd.f32 %v648, %v645
        %v665 = vadd.f32 %v649, %v645
        %v666 = vadd.f32 %v650, %v645
        %v667 = vadd.f32 %v651, %v645
        %v668 = vadd.f32 %v652, %v645
        %v669 = vadd.f32 %v653, %v645
        %v670 = vadd.f32 %v654, %v645
        %v671 = vadd.f32 %v655, %v645
        %v672 = vadd.f32 %v656, %v645
        %v673 = vadd.f32 %v657, %v645
        %v674 = vadd.f32 %v658, %v645
        %v675 = vadd.f32 %v659, %v645
        %v676 = vadd.f32 %v660, %v645
        %v677 = vadd.f32 %v661, %v645
        %v678 = vtanh.pop %v662
        %v679 = vtanh.pop %v663
        %v680 = vtanh.pop %v664
        %v681 = vtanh.pop %v665
        %v682 = vtanh.pop %v666
        %v683 = vtanh.pop %v667
        %v684 = vtanh.pop %v668
        %v685 = vtanh.pop %v669
        %v686 = vtanh.pop %v670
        %v687 = vtanh.pop %v671
        %v688 = vtanh.pop %v672
        %v689 = vtanh.pop %v673
        %v690 = vtanh.pop %v674
        %v691 = vtanh.pop %v675
        %v692 = vtanh.pop %v676
        %v693 = vtanh.pop %v677
        %v694 = vmul.f32 %v678, 0.5
        %v695 = vmul.f32 %v679, 0.5
        %v696 = vmul.f32 %v680, 0.5
        %v697 = vmul.f32 %v681, 0.5
        %v698 = vmul.f32 %v682, 0.5
        %v699 = vmul.f32 %v683, 0.5
        %v700 = vmul.f32 %v684, 0.5
        %v701 = vmul.f32 %v685, 0.5
        %v702 = vmul.f32 %v686, 0.5
        %v703 = vmul.f32 %v687, 0.5
        %v704 = vmul.f32 %v688, 0.5
        %v705 = vmul.f32 %v689, 0.5
        %v706 = vmul.f32 %v690, 0.5
        %v707 = vmul.f32 %v691, 0.5
        %v708 = vmul.f32 %v692, 0.5
        %v709 = vmul.f32 %v693, 0.5
        %v710 = vadd.f32 %v694, 0.5
        %v711 = vadd.f32 %v695, 0.5
        %v712 = vadd.f32 %v696, 0.5
        %v713 = vadd.f32 %v697, 0.5
        %v714 = vadd.f32 %v698, 0.5
        %v715 = vadd.f32 %v699, 0.5
        %v716 = vadd.f32 %v700, 0.5
        %v717 = vadd.f32 %v701, 0.5
        %v718 = vadd.f32 %v702, 0.5
        %v719 = vadd.f32 %v703, 0.5
        %v720 = vadd.f32 %v704, 0.5
        %v721 = vadd.f32 %v705, 0.5
        %v722 = vadd.f32 %v706, 0.5
        %v723 = vadd.f32 %v707, 0.5
        %v724 = vadd.f32 %v708, 0.5
        %v725 = vadd.f32 %v709, 0.5
        %v726 = vsel %vm193, %v710, 0.0
        %v727 = vsel %vm194, %v711, 0.0
        %v728 = vsel %vm195, %v712, 0.0
        %v729 = vsel %vm196, %v713, 0.0
        %v730 = vsel %vm197, %v714, 0.0
        %v731 = vsel %vm198, %v715, 0.0
        %v732 = vsel %vm199, %v716, 0.0
        %v733 = vsel %vm200, %v717, 0.0
        %v734 = vsel %vm201, %v718, 0.0
        %v735 = vsel %vm202, %v719, 0.0
        %v736 = vsel %vm203, %v720, 0.0
        %v737 = vsel %vm204, %v721, 0.0
        %v738 = vsel %vm205, %v722, 0.0
        %v739 = vsel %vm206, %v723, 0.0
        %v740 = vsel %vm207, %v724, 0.0
        %v741 = vsel %vm208, %v725, 0.0
        %742 = vst [vmem:[%s163] sm:$0xff] %v726
        %743 = vst [vmem:[%s163 + $0x8] sm:$0xff] %v727
        %744 = vst [vmem:[%s163 + $0x10] sm:$0xff] %v728
        %745 = vst [vmem:[%s163 + $0x18] sm:$0xff] %v729
        %746 = vst [vmem:[%s163 + $0x20] sm:$0xff] %v730
        %747 = vst [vmem:[%s163 + $0x28] sm:$0xff] %v731
        %748 = vst [vmem:[%s163 + $0x30] sm:$0xff] %v732
        %749 = vst [vmem:[%s163 + $0x38] sm:$0xff] %v733
        %750 = vst [vmem:[%s163 + $0x40] sm:$0xff] %v734
        %751 = vst [vmem:[%s163 + $0x48] sm:$0xff] %v735
        %752 = vst [vmem:[%s163 + $0x50] sm:$0xff] %v736
        %753 = vst [vmem:[%s163 + $0x58] sm:$0xff] %v737
        %754 = vst [vmem:[%s163 + $0x60] sm:$0xff] %v738
        %755 = vst [vmem:[%s163 + $0x68] sm:$0xff] %v739
        %756 = vst [vmem:[%s163 + $0x70] sm:$0xff] %v740
        %757 = vst [vmem:[%s163 + $0x78] sm:$0xff] %v741
        %s758 = sand.u32 %s88, 1
        %s759 = scalar_lea.sflag [#allocation6], %s758
        %s760 = sand.u32 %s88, 1
        %s761 = smul.addr %s760, 128
        %s762 = scalar_lea.vmem [#allocation5], %s761
        // Predicated region
        $region29: #{tpu_custom_call.1} parent=27 // pred_check
          %p763 = pneg %p98
        $region30: #{tpu_custom_call.1} parent=27 // pred_check_branch
          %765 = sbr.rel (%p763) target = $region32
        $region31: #{tpu_custom_call.1} parent=27 // pred_region
          %s767 = ssub.s32 2048, 2048
          %768 = vsyncadd %s759, %s767
          %s769 = smul.addr %s28, 16
          %s770 = smul.addr %s769, 128
          %s771 = scalar_lea.hbm %s4, %s770
          %s772 = sshll.u32 %s762, 4
          %s773 = int_to_ptr.vmem [resolvable:$true] %s772
          %778 = dma.vmem_to_hbm [thread:$0]  %s773, 2048, %s771, %s759, 128, 128, 8
        $region32: #{tpu_custom_call.1} parent=27 // pred_fallthru
          _
      $region28: #{tpu_custom_call.1} parent=5 // pred_fallthru
        _
      %p779 = scmp.le.s32.totalorder 2, %s23
      // Predicated region
      $region33: #{tpu_custom_call.1} parent=5 // pred_check
        %p780 = pneg %p779
      $region34: #{tpu_custom_call.1} parent=5 // pred_check_branch
        %782 = sbr.rel (%p780) target = $region36
      $region35: #{tpu_custom_call.1} parent=5 // pred_region
        %s783 = ssub.s32 %s23, 2
        // Predicated region
        $region37: #{tpu_custom_call.1} parent=35 // pred_check
          %p784 = pneg %p104
        $region38: #{tpu_custom_call.1} parent=35 // pred_check_branch
          %786 = sbr.rel (%p784) target = $region40
        $region39: #{tpu_custom_call.1} parent=35 // pred_region
          %s787 = sand.u32 %s89, 1
          %s788 = scalar_lea.sflag [#allocation6], %s787
          %s789 = sand.u32 %s89, 1
          %s790 = smul.addr %s789, 128
          %s791 = scalar_lea.vmem [#allocation5], %s790
          %792 = dma.done %s788, 2048
        $region40: #{tpu_custom_call.1} parent=35 // pred_fallthru
          _
      $region36: #{tpu_custom_call.1} parent=5 // pred_fallthru
        _
    $region6: #{tpu_custom_call.1} parent=1 // loop_footer
      %s27 = sadd.s32 1, %s23
    $region7: #{tpu_custom_call.1} parent=1 // loop_footer_branch
      %22 = sbr.rel target = $region3
    $region8: #{tpu_custom_call.1} parent=1 // loop_exit
      _
    %793 = vsyncpa [#allocation6], 1
    %s794 = scalar_lea.sflag [#allocation6], 1
    %795 = vsyncpa %s794, 1

</llo_original>
